<compile_context>
chip_gen: v6e
topology: v6e:2x2x1
jax: 0.10.0
libtpu: 0.0.40
codegen_flags: <defaults>
</compile_context>

<pallas_src>
import functools

import jax
import jax.numpy as jnp
from jax.experimental import pallas as pl
from jax.experimental.pallas import tpu as pltpu


def _round_up(x, m):
    return (x + m - 1) // m * m


def _gemm_bias_relu_kernel(p_ref, w_ref, b_ref, o_ref):
    # p_ref: (TM, K_pad)   w_ref: (K_pad, OC_pad)   b_ref: (1, OC_pad) f32
    # o_ref: (TM, OC_pad)  -- lane-dense (OC_pad is a multiple of 128)
    acc = jnp.dot(p_ref[...], w_ref[...], preferred_element_type=jnp.float32)
    acc = acc + b_ref[...]                                   # bias in f32
    o_ref[...] = jnp.maximum(acc, 0.0).astype(o_ref.dtype)   # fused ReLU


@functools.partial(jax.jit,
                   static_argnames=("stride", "compute_dtype", "tile_m"))
def conv_block_forward(x_nchw, w_oihw, bias, stride=1,
                       compute_dtype=jnp.float32, tile_m=256):
    """Conv2d(padding='valid') + ReLU.  NCHW / OIHW interface like nn.Conv2d."""
    n, c, h, w = x_nchw.shape
    oc, ic, kh, kw = w_oihw.shape
    assert ic == c
    sh = sw = stride
    oh = (h - kh) // sh + 1
    ow = (w - kw) // sw + 1

    # --- wrapper-side layout work (im2col, done once in plain JAX) --------
    # TODO(synk): for large inputs, accept/emit NHWC at the model level (or
    # relayout via BlockSpec index_maps) to avoid these HBM transpose passes.
    x_nhwc = jnp.transpose(x_nchw, (0, 2, 3, 1))             # NCHW -> NHWC

    taps = []
    for i in range(kh):
        for j in range(kw):
            taps.append(x_nhwc[:, i:i + (oh - 1) * sh + 1:sh,
                                  j:j + (ow - 1) * sw + 1:sw, :])
    k = kh * kw * c
    patches = jnp.concatenate(taps, axis=-1).reshape(n * oh * ow, k)

    # weights OIHW -> HWIO -> (K, OC); same (i, j, c) flatten order as taps.
    w2d = jnp.transpose(w_oihw, (2, 3, 1, 0)).reshape(k, oc)

    # --- pad to TPU-friendly tile shapes -----------------------------------
    m = n * oh * ow
    tm = min(tile_m, _round_up(m, 8))        # multiple of 8 (sublane)
    m_pad = _round_up(m, tm)
    k_pad = _round_up(k, 8)
    oc_pad = _round_up(oc, 128)              # lane-dense output stores

    patches = jnp.pad(patches, ((0, m_pad - m), (0, k_pad - k)))
    w2d = jnp.pad(w2d, ((0, k_pad - k), (0, oc_pad - oc)))
    b2d = jnp.pad(bias.reshape(1, oc).astype(jnp.float32),
                  ((0, 0), (0, oc_pad - oc)))

    patches = patches.astype(compute_dtype)
    w2d = w2d.astype(compute_dtype)

    out = pl.pallas_call(
        _gemm_bias_relu_kernel,
        out_shape=jax.ShapeDtypeStruct((m_pad, oc_pad), x_nchw.dtype),
        grid=(m_pad // tm,),
        in_specs=[
            pl.BlockSpec((tm, k_pad), lambda i: (i, 0)),        # patch M-tile
            pl.BlockSpec((k_pad, oc_pad), lambda i: (0, 0)),    # flat weights
            pl.BlockSpec((1, oc_pad), lambda i: (0, 0)),        # bias
        ],
        out_specs=pl.BlockSpec((tm, oc_pad), lambda i: (i, 0)),
        compiler_params=pltpu.CompilerParams(
            dimension_semantics=("parallel",)),
    )(patches, w2d, b2d)

    out = out[:m, :oc].reshape(n, oh, ow, oc)                 # drop padding
    return jnp.transpose(out, (0, 3, 1, 2))                   # NHWC -> NCHW


if __name__ == "__main__":
    # ConvBlock(in_channels=4, out_channels=8, kernel_size=3, stride=1,
    #           padding='valid')
    batch, in_ch, hw = 2, 4, 16
    out_ch, ksize, stride = 8, 3, 1

    key = jax.random.PRNGKey(0)
    kx, kw_, kb = jax.random.split(key, 3)
    x = jax.random.normal(kx, (batch, in_ch, hw, hw), dtype=jnp.float32)
    fan_in = in_ch * ksize * ksize
    w = jax.random.normal(kw_, (out_ch, in_ch, ksize, ksize),
                          dtype=jnp.float32) / jnp.sqrt(fan_in)
    b = jax.random.normal(kb, (out_ch,), dtype=jnp.float32) * 0.1

    # XLA reference: conv + bias + relu
    ref = jax.lax.conv_general_dilated(
        x, w, window_strides=(stride, stride), padding="VALID",
        dimension_numbers=("NCHW", "OIHW", "NCHW"))
    ref = jnp.maximum(ref + b[None, :, None, None], 0.0)

    # f32 path (exact to reference within f32 accumulation noise)
    y = jax.block_until_ready(conv_block_forward(x, w, b, stride=stride))
    assert y.shape == (batch, out_ch, hw - ksize + 1, hw - ksize + 1)
    assert jnp.max(jnp.abs(y - ref)) < 1e-4

    # bf16 matmul operands (f32 accumulate / bias / ReLU) -- v6e/v7x path
    y_bf16 = jax.block_until_ready(
        conv_block_forward(x, w, b, stride=stride,
                           compute_dtype=jnp.bfloat16))
    assert y_bf16.shape == y.shape
    assert jnp.max(jnp.abs(y_bf16 - ref)) < 1.5e-1

    print("KERNEL_OK")
</pallas_src>

<mosaic_0001>
module attributes {stable_mosaic.version = 11 : i64} {
  func.func @_gemm_bias_relu_kernel(%arg0: i32, %arg1: memref<256x40xf32, #tpu.memory_space<vmem>>, %arg2: memref<40x128xf32, #tpu.memory_space<vmem>>, %arg3: memref<1x128xf32, #tpu.memory_space<vmem>>, %arg4: memref<256x128xf32, #tpu.memory_space<vmem>>) attributes {dimension_semantics = [#tpu.dimension_semantics<parallel>], iteration_bounds = array<i64: 2>, scalar_prefetch = 0 : i64, scratch_operands = 0 : i64, tpu.core_type = #tpu.core_type<tc>, window_params = [{transform_indices = @transform_0, window_bounds = array<i64: 256, 40>}, {pipeline_mode = #tpu.pipeline_mode<synchronous>, transform_indices = @transform_1, window_bounds = array<i64: 40, 128>}, {pipeline_mode = #tpu.pipeline_mode<synchronous>, transform_indices = @transform_2, window_bounds = array<i64: 1, 128>}, {transform_indices = @transform_3, window_bounds = array<i64: 256, 128>}]} {
    %c0 = arith.constant 0 : index
    %c0_0 = arith.constant 0 : index
    %0 = vector.load %arg1[%c0, %c0_0] : memref<256x40xf32, #tpu.memory_space<vmem>>, vector<256x40xf32>
    %c0_1 = arith.constant 0 : index
    %c0_2 = arith.constant 0 : index
    %1 = vector.load %arg2[%c0_1, %c0_2] : memref<40x128xf32, #tpu.memory_space<vmem>>, vector<40x128xf32>
    %cst = arith.constant dense<0.000000e+00> : vector<256x128xf32>
    %2 = tpu.matmul %0, %1, %cst {dimension_numbers = #tpu.dot_dimension_numbers<[1], [0], [0], [1], [0, 0, 1, 1], [], []>} : vector<256x40xf32>, vector<40x128xf32>, vector<256x128xf32> -> vector<256x128xf32>
    %c0_3 = arith.constant 0 : index
    %c0_4 = arith.constant 0 : index
    %3 = vector.load %arg3[%c0_3, %c0_4] : memref<1x128xf32, #tpu.memory_space<vmem>>, vector<1x128xf32>
    %4 = vector.broadcast %3 : vector<1x128xf32> to vector<256x128xf32>
    %5 = arith.addf %2, %4 : vector<256x128xf32>
    %cst_5 = arith.constant 0.000000e+00 : f32
    %6 = vector.broadcast %cst_5 : f32 to vector<256x128xf32>
    %7 = arith.maximumf %5, %6 : vector<256x128xf32>
    %c0_6 = arith.constant 0 : index
    %c0_7 = arith.constant 0 : index
    %8 = vector.load %arg4[%c0_6, %c0_7] : memref<256x128xf32, #tpu.memory_space<vmem>>, vector<256x128xf32>
    tpu.vector_store %arg4[%c0_6, %c0_7], %7 {strides = array<i32>} : memref<256x128xf32, #tpu.memory_space<vmem>>, vector<256x128xf32>,
    return
  }
  func.func @transform_0(%arg0: i32) -> (i32, i32) {
    %c0_i32 = arith.constant 0 : i32
    %c0_i32_0 = arith.constant 0 : i32
    return %arg0, %c0_i32 : i32, i32
  }
  func.func @transform_1(%arg0: i32) -> (i32, i32) {
    %c0_i32 = arith.constant 0 : i32
    %c0_i32_0 = arith.constant 0 : i32
    %c0_i32_1 = arith.constant 0 : i32
    return %c0_i32, %c0_i32_0 : i32, i32
  }
  func.func @transform_2(%arg0: i32) -> (i32, i32) {
    %c0_i32 = arith.constant 0 : i32
    %c0_i32_0 = arith.constant 0 : i32
    %c0_i32_1 = arith.constant 0 : i32
    return %c0_i32, %c0_i32_0 : i32, i32
  }
  func.func @transform_3(%arg0: i32) -> (i32, i32) {
    %c0_i32 = arith.constant 0 : i32
    %c0_i32_0 = arith.constant 0 : i32
    return %arg0, %c0_i32 : i32, i32
  }
}

</mosaic_0001>

<llo_original>
// kernel: conv_block_forward.1
$region0: #{conv_block_forward.1}
  #allocation0 [shape = 'u32[]', space=smem, size = 0x4, offset = 0x4, fixed_abs, tag = 'smem constant byte address 0x4 - core index']
  #allocation1 [shape = 'u32[144,128]{1,0:T(1,128)}', space=vmem, size = 0x12000, scoped, tag = 'internal scratch']
  %s0 = inlined_call_operand.vmem [shape: f32[512,40], index: 0, kind: input, shape index: {}]
  %s1 = inlined_call_operand.vmem [shape: f32[40,128], index: 1, kind: input, shape index: {}]
  %s2 = inlined_call_operand.vmem [shape: f32[1,128], index: 2, kind: input, shape index: {}]
  %s3 = inlined_call_operand.vmem [shape: f32[512,128], index: 3, kind: output, shape index: {}]
  %s4 = sld [smem:[#allocation0]]
  $region45: #{conv_block_forward.1} parent=0
    _
  %s6 = ssub.s32 1, %s4
  %s7 = scalar_select 0, %s6, %s4
  loop: start=0, step=1, limit=4
  $region2: #{conv_block_forward.1} parent=0 // loop_pre_header
    _
  $region3: #{conv_block_forward.1} parent=0 // loop_header
    %s9 = sphi 0, %s13
    %p10 = scmp.ge.s32.totalorder %s9, 4
    %s19 = sphi 0, %s21
    %s22 = sphi 0, %s19
    %s23 = sphi 0, %s22
    %s39 = sphi 0, %s23
    %s43 = sphi 0, %s43
    %s45 = sphi 0, %s43
    %s46 = sphi 0, %s45
    %s60 = sphi 0, %s46
    %s64 = sphi 0, %s64
    %s66 = sphi 0, %s64
    %s67 = sphi 0, %s66
    %s81 = sphi 0, %s67
    %s87 = sphi 0, %s89
    %s90 = sphi 0, %s87
    %s91 = sphi 0, %s90
    %s107 = sphi 0, %s91
  $region4: #{conv_block_forward.1} parent=0 // loop_header_branch
    %12 = sbr.rel (%p10) target = $region8
  $region5: #{conv_block_forward.1} parent=0 // loop_body
    %s14 = ssub.s32 %s9, 1
    %s15 = ssub.s32 %s9, 2
    %s16 = sadd.s32 %s9, 1
    %s17 = ssub.s32 %s9, %s16
    %p18 = scmp.eq.s32.totalorder %s17, 0
    %s20 = sadd.s32 %s19, 1
    %s21 = scalar_select %p18, %s19, %s20
    %p24 = pneg %p18
    %p25 = scmp.eq.s32.totalorder %s9, 1
    %p26 = por %p24, %p25
    %p27 = scmp.ne.s32.totalorder %s19, %s22
    %p28 = scmp.eq.s32.totalorder %s9, 0
    %p29 = por %p27, %p28
    %p30 = scmp.ne.s32.totalorder %s19, %s22
    %p31 = scmp.eq.s32.totalorder %s14, 1
    %p32 = por %p30, %p31
    %p33 = scmp.ne.s32.totalorder %s22, %s23
    %p34 = scmp.eq.s32.totalorder %s14, 0
    %p35 = por %p33, %p34
    %p36 = scmp.ne.s32.totalorder %s22, %s23
    %p37 = scmp.eq.s32.totalorder %s15, 1
    %p38 = por %p36, %p37
    %p40 = scmp.ne.s32.totalorder %s23, %s39
    %p41 = scmp.eq.s32.totalorder %s15, 0
    %p42 = por %p40, %p41
    %s44 = sadd.s32 %s43, 1
    %p47 = scmp.eq.s32.totalorder %s9, 1
    %p48 = scmp.ne.s32.totalorder %s43, %s45
    %p49 = scmp.eq.s32.totalorder %s9, 0
    %p50 = por %p48, %p49
    %p51 = scmp.ne.s32.totalorder %s43, %s45
    %p52 = scmp.eq.s32.totalorder %s14, 1
    %p53 = por %p51, %p52
    %p54 = scmp.ne.s32.totalorder %s45, %s46
    %p55 = scmp.eq.s32.totalorder %s14, 0
    %p56 = por %p54, %p55
    %p57 = scmp.ne.s32.totalorder %s45, %s46
    %p58 = scmp.eq.s32.totalorder %s15, 1
    %p59 = por %p57, %p58
    %p61 = scmp.ne.s32.totalorder %s46, %s60
    %p62 = scmp.eq.s32.totalorder %s15, 0
    %p63 = por %p61, %p62
    %s65 = sadd.s32 %s64, 1
    %p68 = scmp.eq.s32.totalorder %s9, 1
    %p69 = scmp.ne.s32.totalorder %s64, %s66
    %p70 = scmp.eq.s32.totalorder %s9, 0
    %p71 = por %p69, %p70
    %p72 = scmp.ne.s32.totalorder %s64, %s66
    %p73 = scmp.eq.s32.totalorder %s14, 1
    %p74 = por %p72, %p73
    %p75 = scmp.ne.s32.totalorder %s66, %s67
    %p76 = scmp.eq.s32.totalorder %s14, 0
    %p77 = por %p75, %p76
    %p78 = scmp.ne.s32.totalorder %s66, %s67
    %p79 = scmp.eq.s32.totalorder %s15, 1
    %p80 = por %p78, %p79
    %p82 = scmp.ne.s32.totalorder %s67, %s81
    %p83 = scmp.eq.s32.totalorder %s15, 0
    %p84 = por %p82, %p83
    %s85 = ssub.s32 %s9, %s16
    %p86 = scmp.eq.s32.totalorder %s85, 0
    %s88 = sadd.s32 %s87, 1
    %s89 = scalar_select %p86, %s87, %s88
    %p92 = pneg %p86
    %p93 = scmp.eq.s32.totalorder %s9, 1
    %p94 = por %p92, %p93
    %p95 = scmp.ne.s32.totalorder %s87, %s90
    %p96 = scmp.eq.s32.totalorder %s9, 0
    %p97 = por %p95, %p96
    %p98 = scmp.ne.s32.totalorder %s87, %s90
    %p99 = scmp.eq.s32.totalorder %s14, 1
    %p100 = por %p98, %p99
    %p101 = scmp.ne.s32.totalorder %s90, %s91
    %p102 = scmp.eq.s32.totalorder %s14, 0
    %p103 = por %p101, %p102
    %p104 = scmp.ne.s32.totalorder %s90, %s91
    %p105 = scmp.eq.s32.totalorder %s15, 1
    %p106 = por %p104, %p105
    %p108 = scmp.ne.s32.totalorder %s91, %s107
    %p109 = scmp.eq.s32.totalorder %s15, 0
    %p110 = por %p108, %p109
    %p111 = scmp.le.s32.totalorder 1, %s9
    %p112 = scmp.lt.s32.totalorder %s9, 3
    %p113 = pnand %p111, %p112
    %p114 = pneg %p113
    // Predicated region
    $region9: #{conv_block_forward.1} parent=5 // pred_check
      _
    $region10: #{conv_block_forward.1} parent=5 // pred_check_branch
      %116 = sbr.rel (%p113) target = $region12
    $region11: #{conv_block_forward.1} parent=5 // pred_region
      %s117 = ssub.s32 %s9, 1
      // Predicated region
      $region13: #{conv_block_forward.1} parent=11 // pred_check
        %p118 = pneg %p56
      $region14: #{conv_block_forward.1} parent=11 // pred_check_branch
        %120 = sbr.rel (%p118) target = $region16
      $region15: #{conv_block_forward.1} parent=11 // pred_region
        _
      $region16: #{conv_block_forward.1} parent=11 // pred_fallthru
        _
      // Predicated region
      $region17: #{conv_block_forward.1} parent=11 // pred_check
        %p121 = pneg %p77
      $region18: #{conv_block_forward.1} parent=11 // pred_check_branch
        %123 = sbr.rel (%p121) target = $region20
      $region19: #{conv_block_forward.1} parent=11 // pred_region
        _
      $region20: #{conv_block_forward.1} parent=11 // pred_fallthru
        _
    $region12: #{conv_block_forward.1} parent=5 // pred_fallthru
      _
    %p124 = scmp.lt.s32.totalorder %s9, 2
    // Predicated region
    $region21: #{conv_block_forward.1} parent=5 // pred_check
      %p125 = pneg %p124
    $region22: #{conv_block_forward.1} parent=5 // pred_check_branch
      %127 = sbr.rel (%p125) target = $region24
    $region23: #{conv_block_forward.1} parent=5 // pred_region
      // Predicated region
      $region25: #{conv_block_forward.1} parent=23 // pred_check
        %p128 = pneg %p29
      $region26: #{conv_block_forward.1} parent=23 // pred_check_branch
        %130 = sbr.rel (%p128) target = $region28
      $region27: #{conv_block_forward.1} parent=23 // pred_region
        %s131 = smul.u32 32, %s9
        %p132 = scmp.lt.s32.totalorder %s131, 63
        %s133 = scalar_select %p132, %s131, 63
        %s134 = smul.addr %s133, 8
        %s135 = scalar_lea.vmem %s0, %s134
        %s136 = smul.u32 32, %s9
      $region28: #{conv_block_forward.1} parent=23 // pred_fallthru
        _
    $region24: #{conv_block_forward.1} parent=5 // pred_fallthru
      _
    %p137 = scmp.le.s32.totalorder 1, %s9
    %p138 = scmp.lt.s32.totalorder %s9, 3
    %p139 = pnand %p137, %p138
    %p140 = pneg %p139
    // Predicated region
    $region29: #{conv_block_forward.1} parent=5 // pred_check
      _
    $region30: #{conv_block_forward.1} parent=5 // pred_check_branch
      %142 = sbr.rel (%p139) target = $region32
    $region31: #{conv_block_forward.1} parent=5 // pred_region
      %s143 = ssub.s32 %s9, 1
      %s144 = smul.u32 32, %s14
      %p145 = scmp.lt.s32.totalorder %s144, 63
      %s146 = scalar_select %p145, %s144, 63
      %s147 = smul.addr %s146, 8
      %s148 = scalar_lea.vmem %s0, %s147
      %p149 = pneg %p35
      %p150 = pneg %p32
      %p151 = pneg %p56
      %p152 = pneg %p53
      %p153 = pneg %p77
      %p154 = pneg %p74
      %p155 = pneg %p103
      %p156 = pneg %p100
      %s157 = smul.u32 32, %s14
      %p158 = scmp.lt.s32.totalorder %s157, 63
      %s159 = scalar_select %p158, %s157, 63
      %s160 = smul.addr %s159, 8
      %s161 = scalar_lea.vmem %s3, %s160
      %s162 = smul.u32 32, %s14
      %p163 = scmp.lt.s32.totalorder %s162, 63
      %s164 = scalar_select %p163, %s162, 63
      %s165 = smul.addr %s164, 8
      %s166 = scalar_lea.vmem %s0, %s165
      %s167 = smul.u32 32, %s14
      %s168 = smul.u32 32, %s14
      %p169 = scmp.lt.s32.totalorder %s168, 63
      %s170 = scalar_select %p169, %s168, 63
      %s171 = smul.addr %s170, 8
      %s172 = scalar_lea.vmem %s3, %s171
      %s173 = smul.u32 32, %s14
      %v174 = vld [vmem:[%s166] sm:$0xff]
      %v175 = vld [vmem:[%s166 + $0x8] sm:$0xff]
      %v176 = vld [vmem:[%s166 + $0x10] sm:$0xff]
      %v177 = vld [vmem:[%s166 + $0x18] sm:$0xff]
      %v178 = vld [vmem:[%s166 + $0x20] sm:$0xff]
      %v179 = vld [vmem:[%s166 + $0x28] sm:$0xff]
      %v180 = vld [vmem:[%s166 + $0x30] sm:$0xff]
      %v181 = vld [vmem:[%s166 + $0x38] sm:$0xff]
      %v182 = vld [vmem:[%s166 + $0x40] sm:$0xff]
      %v183 = vld [vmem:[%s166 + $0x48] sm:$0xff]
      %v184 = vld [vmem:[%s166 + $0x50] sm:$0xff]
      %v185 = vld [vmem:[%s166 + $0x58] sm:$0xff]
      %v186 = vld [vmem:[%s166 + $0x60] sm:$0xff]
      %v187 = vld [vmem:[%s166 + $0x68] sm:$0xff]
      %v188 = vld [vmem:[%s166 + $0x70] sm:$0xff]
      %v189 = vld [vmem:[%s166 + $0x78] sm:$0xff]
      %v190 = vld [vmem:[%s166 + $0x80] sm:$0xff]
      %v191 = vld [vmem:[%s166 + $0x88] sm:$0xff]
      %v192 = vld [vmem:[%s166 + $0x90] sm:$0xff]
      %v193 = vld [vmem:[%s166 + $0x98] sm:$0xff]
      %v194 = vld [vmem:[%s166 + $0xa0] sm:$0xff]
      %v195 = vld [vmem:[%s166 + $0xa8] sm:$0xff]
      %v196 = vld [vmem:[%s166 + $0xb0] sm:$0xff]
      %v197 = vld [vmem:[%s166 + $0xb8] sm:$0xff]
      %v198 = vld [vmem:[%s166 + $0xc0] sm:$0xff]
      %v199 = vld [vmem:[%s166 + $0xc8] sm:$0xff]
      %v200 = vld [vmem:[%s166 + $0xd0] sm:$0xff]
      %v201 = vld [vmem:[%s166 + $0xd8] sm:$0xff]
      %v202 = vld [vmem:[%s166 + $0xe0] sm:$0xff]
      %v203 = vld [vmem:[%s166 + $0xe8] sm:$0xff]
      %v204 = vld [vmem:[%s166 + $0xf0] sm:$0xff]
      %v205 = vld [vmem:[%s166 + $0xf8] sm:$0xff]
      %v206 = vld [vmem:[%s1] sm:$0xff]
      %v207 = vld [vmem:[%s1 + $0x8] sm:$0xff]
      %v208 = vld [vmem:[%s1 + $0x10] sm:$0xff]
      %v209 = vld [vmem:[%s1 + $0x18] sm:$0xff]
      %v210 = vld [vmem:[%s1 + $0x20] sm:$0xff]
      %v211 = vld [vmem:[%s2] sm:$0x1]
      %v213 = vlaneseq
      %v214 = vshrl.u32 %v213, 7
      %v215 = vsub.s32 0, %v214
      %v216 = vrot.slane %v211, %v215
      %vm218 = vcmask 326656
      %v220 = vsel %vm218, %v174, 0
      %v223 = vsel %vm218, %v175, 0
      %v226 = vsel %vm218, %v176, 0
      %v229 = vsel %vm218, %v177, 0
      %v232 = vsel %vm218, %v178, 0
      %v235 = vsel %vm218, %v179, 0
      %v238 = vsel %vm218, %v180, 0
      %v241 = vsel %vm218, %v181, 0
      %v244 = vsel %vm218, %v182, 0
      %v247 = vsel %vm218, %v183, 0
      %v250 = vsel %vm218, %v184, 0
      %v253 = vsel %vm218, %v185, 0
      %v256 = vsel %vm218, %v186, 0
      %v259 = vsel %vm218, %v187, 0
      %v262 = vsel %vm218, %v188, 0
      %v265 = vsel %vm218, %v189, 0
      %v268 = vsel %vm218, %v190, 0
      %v271 = vsel %vm218, %v191, 0
      %v274 = vsel %vm218, %v192, 0
      %v277 = vsel %vm218, %v193, 0
      %v280 = vsel %vm218, %v194, 0
      %v283 = vsel %vm218, %v195, 0
      %v286 = vsel %vm218, %v196, 0
      %v289 = vsel %vm218, %v197, 0
      %v292 = vsel %vm218, %v198, 0
      %v295 = vsel %vm218, %v199, 0
      %v298 = vsel %vm218, %v200, 0
      %v301 = vsel %vm218, %v201, 0
      %v304 = vsel %vm218, %v202, 0
      %v307 = vsel %vm218, %v203, 0
      %v310 = vsel %vm218, %v204, 0
      %v313 = vsel %vm218, %v205, 0
      %315 = vmatprep.subr.mxu0 0.0
      %316 = vmatpush1.msra.mxu0 0.0
      %317 = vmatprep.subr.mxu0 0.0
      %318 = vmatpush1.msra.mxu0 0.0
      %319 = vmatprep.subr.mxu0 0.0
      %320 = vmatpush1.msra.mxu0 0.0
      %321 = vmatprep.subr.mxu0 0.0
      %322 = vmatpush1.msra.mxu0 0.0
      %323 = vmatprep.subr.mxu0 0.0
      %324 = vmatpush1.msra.mxu0 0.0
      %325 = vmatprep.subr.mxu0 0.0
      %326 = vmatpush1.msra.mxu0 0.0
      %327 = vmatprep.subr.mxu0 0.0
      %328 = vmatpush1.msra.mxu0 0.0
      %329 = vmatprep.subr.mxu0 0.0
      %330 = vmatpush1.msra.mxu0 0.0
      %331 = vmatprep.subr.mxu0 0.0
      %332 = vmatpush1.msra.mxu0 0.0
      %333 = vmatprep.subr.mxu0 0.0
      %334 = vmatpush1.msra.mxu0 0.0
      %335 = vmatprep.subr.mxu0 0.0
      %336 = vmatpush1.msra.mxu0 0.0
      %337 = vmatprep.subr.mxu0 0.0
      %338 = vmatpush1.msra.mxu0 %v210
      %339 = vmatprep.subr.mxu0 0.0
      %340 = vmatpush1.msra.mxu0 %v209
      %341 = vmatprep.subr.mxu0 0.0
      %342 = vmatpush1.msra.mxu0 %v208
      %343 = vmatprep.subr.mxu0 0.0
      %344 = vmatpush1.msra.mxu0 %v207
      %345 = vmatprep.subr.mxu0 0.0
      %346 = vmatpush1.msra.mxu0 %v206
      %347 = vmatprep.subr.mxu0 0.0
      %348 = vmatpush2.msra.mxu0 0.0
      %349 = vmatprep.subr.mxu0 0.0
      %350 = vmatpush2.msra.mxu0 0.0
      %351 = vmatprep.subr.mxu0 0.0
      %352 = vmatpush2.msra.mxu0 0.0
      %353 = vmatprep.subr.mxu0 0.0
      %354 = vmatpush2.msra.mxu0 0.0
      %355 = vmatprep.subr.mxu0 0.0
      %356 = vmatpush2.msra.mxu0 0.0
      %357 = vmatprep.subr.mxu0 0.0
      %358 = vmatpush2.msra.mxu0 0.0
      %359 = vmatprep.subr.mxu0 0.0
      %360 = vmatpush2.msra.mxu0 0.0
      %361 = vmatprep.subr.mxu0 0.0
      %362 = vmatpush2.msra.mxu0 0.0
      %363 = vmatprep.subr.mxu0 0.0
      %364 = vmatpush2.msra.mxu0 0.0
      %365 = vmatprep.subr.mxu0 0.0
      %366 = vmatpush2.msra.mxu0 0.0
      %367 = vmatprep.subr.mxu0 0.0
      %368 = vmatpush2.msra.mxu0 0.0
      %369 = vmatprep.subr.mxu0 0.0
      %370 = vmatpush2.msra.mxu0 0.0
      %371 = vmatprep.subr.mxu0 0.0
      %372 = vmatpush2.msra.mxu0 0.0
      %373 = vmatprep.subr.mxu0 0.0
      %374 = vmatpush2.msra.mxu0 0.0
      %375 = vmatprep.subr.mxu0 0.0
      %376 = vmatpush2.msra.mxu0 0.0
      %377 = vmatprep.subr.mxu0 0.0
      %378 = vmatpush2.msra.mxu0 0.0
      %379 = vmatprep.mubr.f32.mxu0 0.0
      %380 = vmatmul.mubr.f32.gmra.mxu0 %v220
      %v381 = vpop.f32.mrf.mxu0
      %v382 = vadd.f32 %v216, %v381
      %v383 = vpop.f32.mrf.mxu0
      %384 = vmatprep.mubr.f32.mxu0 0.0
      %385 = vmatmul.mubr.f32.gmra.mxu0 %v223
      %v386 = vpop.f32.mrf.mxu0
      %v387 = vadd.f32 %v216, %v386
      %v388 = vpop.f32.mrf.mxu0
      %389 = vmatprep.mubr.f32.mxu0 0.0
      %390 = vmatmul.mubr.f32.gmra.mxu0 %v226
      %v391 = vpop.f32.mrf.mxu0
      %v392 = vadd.f32 %v216, %v391
      %v393 = vpop.f32.mrf.mxu0
      %394 = vmatprep.mubr.f32.mxu0 0.0
      %395 = vmatmul.mubr.f32.gmra.mxu0 %v229
      %v396 = vpop.f32.mrf.mxu0
      %v397 = vadd.f32 %v216, %v396
      %v398 = vpop.f32.mrf.mxu0
      %399 = vmatprep.mubr.f32.mxu0 0.0
      %400 = vmatmul.mubr.f32.gmra.mxu0 %v232
      %v401 = vpop.f32.mrf.mxu0
      %v402 = vadd.f32 %v216, %v401
      %v403 = vpop.f32.mrf.mxu0
      %404 = vmatprep.mubr.f32.mxu0 0.0
      %405 = vmatmul.mubr.f32.gmra.mxu0 %v235
      %v406 = vpop.f32.mrf.mxu0
      %v407 = vadd.f32 %v216, %v406
      %v408 = vpop.f32.mrf.mxu0
      %409 = vmatprep.mubr.f32.mxu0 0.0
      %410 = vmatmul.mubr.f32.gmra.mxu0 %v238
      %v411 = vpop.f32.mrf.mxu0
      %v412 = vadd.f32 %v216, %v411
      %v413 = vpop.f32.mrf.mxu0
      %414 = vmatprep.mubr.f32.mxu0 0.0
      %415 = vmatmul.mubr.f32.gmra.mxu0 %v241
      %v416 = vpop.f32.mrf.mxu0
      %v417 = vadd.f32 %v216, %v416
      %v418 = vpop.f32.mrf.mxu0
      %419 = vmatprep.mubr.f32.mxu0 0.0
      %420 = vmatmul.mubr.f32.gmra.mxu0 %v244
      %v421 = vpop.f32.mrf.mxu0
      %v422 = vadd.f32 %v216, %v421
      %v423 = vpop.f32.mrf.mxu0
      %424 = vmatprep.mubr.f32.mxu0 0.0
      %425 = vmatmul.mubr.f32.gmra.mxu0 %v247
      %v426 = vpop.f32.mrf.mxu0
      %v427 = vadd.f32 %v216, %v426
      %v428 = vpop.f32.mrf.mxu0
      %429 = vmatprep.mubr.f32.mxu0 0.0
      %430 = vmatmul.mubr.f32.gmra.mxu0 %v250
      %v431 = vpop.f32.mrf.mxu0
      %v432 = vadd.f32 %v216, %v431
      %v433 = vpop.f32.mrf.mxu0
      %434 = vmatprep.mubr.f32.mxu0 0.0
      %435 = vmatmul.mubr.f32.gmra.mxu0 %v253
      %v436 = vpop.f32.mrf.mxu0
      %v437 = vadd.f32 %v216, %v436
      %v438 = vpop.f32.mrf.mxu0
      %439 = vmatprep.mubr.f32.mxu0 0.0
      %440 = vmatmul.mubr.f32.gmra.mxu0 %v256
      %v441 = vpop.f32.mrf.mxu0
      %v442 = vadd.f32 %v216, %v441
      %v443 = vpop.f32.mrf.mxu0
      %444 = vmatprep.mubr.f32.mxu0 0.0
      %445 = vmatmul.mubr.f32.gmra.mxu0 %v259
      %v446 = vpop.f32.mrf.mxu0
      %v447 = vadd.f32 %v216, %v446
      %v448 = vpop.f32.mrf.mxu0
      %449 = vmatprep.mubr.f32.mxu0 0.0
      %450 = vmatmul.mubr.f32.gmra.mxu0 %v262
      %v451 = vpop.f32.mrf.mxu0
      %v452 = vadd.f32 %v216, %v451
      %v453 = vpop.f32.mrf.mxu0
      %454 = vmatprep.mubr.f32.mxu0 0.0
      %455 = vmatmul.mubr.f32.gmra.mxu0 %v265
      %v456 = vpop.f32.mrf.mxu0
      %v457 = vadd.f32 %v216, %v456
      %v458 = vpop.f32.mrf.mxu0
      %459 = vmatprep.mubr.f32.mxu0 0.0
      %460 = vmatmul.mubr.f32.gmra.mxu0 %v268
      %v461 = vpop.f32.mrf.mxu0
      %v462 = vadd.f32 %v216, %v461
      %v463 = vpop.f32.mrf.mxu0
      %464 = vmatprep.mubr.f32.mxu0 0.0
      %465 = vmatmul.mubr.f32.gmra.mxu0 %v271
      %v466 = vpop.f32.mrf.mxu0
      %v467 = vadd.f32 %v216, %v466
      %v468 = vpop.f32.mrf.mxu0
      %469 = vmatprep.mubr.f32.mxu0 0.0
      %470 = vmatmul.mubr.f32.gmra.mxu0 %v274
      %v471 = vpop.f32.mrf.mxu0
      %v472 = vadd.f32 %v216, %v471
      %v473 = vpop.f32.mrf.mxu0
      %474 = vmatprep.mubr.f32.mxu0 0.0
      %475 = vmatmul.mubr.f32.gmra.mxu0 %v277
      %v476 = vpop.f32.mrf.mxu0
      %v477 = vadd.f32 %v216, %v476
      %v478 = vpop.f32.mrf.mxu0
      %479 = vmatprep.mubr.f32.mxu0 0.0
      %480 = vmatmul.mubr.f32.gmra.mxu0 %v280
      %v481 = vpop.f32.mrf.mxu0
      %v482 = vadd.f32 %v216, %v481
      %v483 = vpop.f32.mrf.mxu0
      %484 = vmatprep.mubr.f32.mxu0 0.0
      %485 = vmatmul.mubr.f32.gmra.mxu0 %v283
      %v486 = vpop.f32.mrf.mxu0
      %v487 = vadd.f32 %v216, %v486
      %v488 = vpop.f32.mrf.mxu0
      %489 = vmatprep.mubr.f32.mxu0 0.0
      %490 = vmatmul.mubr.f32.gmra.mxu0 %v286
      %v491 = vpop.f32.mrf.mxu0
      %v492 = vadd.f32 %v216, %v491
      %v493 = vpop.f32.mrf.mxu0
      %494 = vmatprep.mubr.f32.mxu0 0.0
      %495 = vmatmul.mubr.f32.gmra.mxu0 %v289
      %v496 = vpop.f32.mrf.mxu0
      %v497 = vadd.f32 %v216, %v496
      %v498 = vpop.f32.mrf.mxu0
      %499 = vmatprep.mubr.f32.mxu0 0.0
      %500 = vmatmul.mubr.f32.gmra.mxu0 %v292
      %v501 = vpop.f32.mrf.mxu0
      %v502 = vadd.f32 %v216, %v501
      %v503 = vpop.f32.mrf.mxu0
      %504 = vmatprep.mubr.f32.mxu0 0.0
      %505 = vmatmul.mubr.f32.gmra.mxu0 %v295
      %v506 = vpop.f32.mrf.mxu0
      %v507 = vadd.f32 %v216, %v506
      %v508 = vpop.f32.mrf.mxu0
      %509 = vmatprep.mubr.f32.mxu0 0.0
      %510 = vmatmul.mubr.f32.gmra.mxu0 %v298
      %v511 = vpop.f32.mrf.mxu0
      %v512 = vadd.f32 %v216, %v511
      %v513 = vpop.f32.mrf.mxu0
      %514 = vmatprep.mubr.f32.mxu0 0.0
      %515 = vmatmul.mubr.f32.gmra.mxu0 %v301
      %v516 = vpop.f32.mrf.mxu0
      %v517 = vadd.f32 %v216, %v516
      %v518 = vpop.f32.mrf.mxu0
      %519 = vmatprep.mubr.f32.mxu0 0.0
      %520 = vmatmul.mubr.f32.gmra.mxu0 %v304
      %v521 = vpop.f32.mrf.mxu0
      %v522 = vadd.f32 %v216, %v521
      %v523 = vpop.f32.mrf.mxu0
      %524 = vmatprep.mubr.f32.mxu0 0.0
      %525 = vmatmul.mubr.f32.gmra.mxu0 %v307
      %v526 = vpop.f32.mrf.mxu0
      %v527 = vadd.f32 %v216, %v526
      %v528 = vpop.f32.mrf.mxu0
      %529 = vmatprep.mubr.f32.mxu0 0.0
      %530 = vmatmul.mubr.f32.gmra.mxu0 %v310
      %v531 = vpop.f32.mrf.mxu0
      %v532 = vadd.f32 %v216, %v531
      %v533 = vpop.f32.mrf.mxu0
      %534 = vmatprep.mubr.f32.mxu0 0.0
      %535 = vmatmul.mubr.f32.gmra.mxu0 %v313
      %v536 = vpop.f32.mrf.mxu0
      %v537 = vadd.f32 %v216, %v536
      %v538 = vpop.f32.mrf.mxu0
      %539 = vdwg.mxu0
      %v540 = vmax.f32 %v382, 0.0
      %v541 = vmax.f32 %v387, 0.0
      %v542 = vmax.f32 %v392, 0.0
      %v543 = vmax.f32 %v397, 0.0
      %v544 = vmax.f32 %v402, 0.0
      %v545 = vmax.f32 %v407, 0.0
      %v546 = vmax.f32 %v412, 0.0
      %v547 = vmax.f32 %v417, 0.0
      %v548 = vmax.f32 %v422, 0.0
      %v549 = vmax.f32 %v427, 0.0
      %v550 = vmax.f32 %v432, 0.0
      %v551 = vmax.f32 %v437, 0.0
      %v552 = vmax.f32 %v442, 0.0
      %v553 = vmax.f32 %v447, 0.0
      %v554 = vmax.f32 %v452, 0.0
      %v555 = vmax.f32 %v457, 0.0
      %v556 = vmax.f32 %v462, 0.0
      %v557 = vmax.f32 %v467, 0.0
      %v558 = vmax.f32 %v472, 0.0
      %v559 = vmax.f32 %v477, 0.0
      %v560 = vmax.f32 %v482, 0.0
      %v561 = vmax.f32 %v487, 0.0
      %v562 = vmax.f32 %v492, 0.0
      %v563 = vmax.f32 %v497, 0.0
      %v564 = vmax.f32 %v502, 0.0
      %v565 = vmax.f32 %v507, 0.0
      %v566 = vmax.f32 %v512, 0.0
      %v567 = vmax.f32 %v517, 0.0
      %v568 = vmax.f32 %v522, 0.0
      %v569 = vmax.f32 %v527, 0.0
      %v570 = vmax.f32 %v532, 0.0
      %v571 = vmax.f32 %v537, 0.0
      %572 = vst [vmem:[%s172] sm:$0xff] %v540
      %573 = vst [vmem:[%s172 + $0x8] sm:$0xff] %v541
      %574 = vst [vmem:[%s172 + $0x10] sm:$0xff] %v542
      %575 = vst [vmem:[%s172 + $0x18] sm:$0xff] %v543
      %576 = vst [vmem:[%s172 + $0x20] sm:$0xff] %v544
      %577 = vst [vmem:[%s172 + $0x28] sm:$0xff] %v545
      %578 = vst [vmem:[%s172 + $0x30] sm:$0xff] %v546
      %579 = vst [vmem:[%s172 + $0x38] sm:$0xff] %v547
      %580 = vst [vmem:[%s172 + $0x40] sm:$0xff] %v548
      %581 = vst [vmem:[%s172 + $0x48] sm:$0xff] %v549
      %582 = vst [vmem:[%s172 + $0x50] sm:$0xff] %v550
      %583 = vst [vmem:[%s172 + $0x58] sm:$0xff] %v551
      %584 = vst [vmem:[%s172 + $0x60] sm:$0xff] %v552
      %585 = vst [vmem:[%s172 + $0x68] sm:$0xff] %v553
      %586 = vst [vmem:[%s172 + $0x70] sm:$0xff] %v554
      %587 = vst [vmem:[%s172 + $0x78] sm:$0xff] %v555
      %588 = vst [vmem:[%s172 + $0x80] sm:$0xff] %v556
      %589 = vst [vmem:[%s172 + $0x88] sm:$0xff] %v557
      %590 = vst [vmem:[%s172 + $0x90] sm:$0xff] %v558
      %591 = vst [vmem:[%s172 + $0x98] sm:$0xff] %v559
      %592 = vst [vmem:[%s172 + $0xa0] sm:$0xff] %v560
      %593 = vst [vmem:[%s172 + $0xa8] sm:$0xff] %v561
      %594 = vst [vmem:[%s172 + $0xb0] sm:$0xff] %v562
      %595 = vst [vmem:[%s172 + $0xb8] sm:$0xff] %v563
      %596 = vst [vmem:[%s172 + $0xc0] sm:$0xff] %v564
      %597 = vst [vmem:[%s172 + $0xc8] sm:$0xff] %v565
      %598 = vst [vmem:[%s172 + $0xd0] sm:$0xff] %v566
      %599 = vst [vmem:[%s172 + $0xd8] sm:$0xff] %v567
      %600 = vst [vmem:[%s172 + $0xe0] sm:$0xff] %v568
      %601 = vst [vmem:[%s172 + $0xe8] sm:$0xff] %v569
      %602 = vst [vmem:[%s172 + $0xf0] sm:$0xff] %v570
      %603 = vst [vmem:[%s172 + $0xf8] sm:$0xff] %v571
      %s604 = smul.u32 32, %s14
      %p605 = scmp.lt.s32.totalorder %s604, 63
      %s606 = scalar_select %p605, %s604, 63
      %s607 = smul.addr %s606, 8
      %s608 = scalar_lea.vmem %s3, %s607
      // Predicated region
      $region33: #{conv_block_forward.1} parent=31 // pred_check
        %p609 = pneg %p100
      $region34: #{conv_block_forward.1} parent=31 // pred_check_branch
        %611 = sbr.rel (%p609) target = $region36
      $region35: #{conv_block_forward.1} parent=31 // pred_region
        %s612 = smul.u32 32, %s14
      $region36: #{conv_block_forward.1} parent=31 // pred_fallthru
        _
    $region32: #{conv_block_forward.1} parent=5 // pred_fallthru
      _
    %p613 = scmp.le.s32.totalorder 2, %s9
    // Predicated region
    $region37: #{conv_block_forward.1} parent=5 // pred_check
      %p614 = pneg %p613
    $region38: #{conv_block_forward.1} parent=5 // pred_check_branch
      %616 = sbr.rel (%p614) target = $region40
    $region39: #{conv_block_forward.1} parent=5 // pred_region
      %s617 = ssub.s32 %s9, 2
      // Predicated region
      $region41: #{conv_block_forward.1} parent=39 // pred_check
        %p618 = pneg %p106
      $region42: #{conv_block_forward.1} parent=39 // pred_check_branch
        %620 = sbr.rel (%p618) target = $region44
      $region43: #{conv_block_forward.1} parent=39 // pred_region
        %s621 = smul.u32 32, %s15
        %p622 = scmp.lt.s32.totalorder %s621, 63
        %s623 = scalar_select %p622, %s621, 63
        %s624 = smul.addr %s623, 8
        %s625 = scalar_lea.vmem %s3, %s624
      $region44: #{conv_block_forward.1} parent=39 // pred_fallthru
        _
    $region40: #{conv_block_forward.1} parent=5 // pred_fallthru
      _
  $region6: #{conv_block_forward.1} parent=0 // loop_footer
    %s13 = sadd.s32 1, %s9
  $region7: #{conv_block_forward.1} parent=0 // loop_footer_branch
    %8 = sbr.rel target = $region3
  $region8: #{conv_block_forward.1} parent=0 // loop_exit
    _

</llo_original>
